<compile_context>
chip_gen: v5e
topology: v5e:2x2
jax: 0.10.0
libtpu: 0.0.40
codegen_flags: <defaults>
</compile_context>

<pallas_src>
import math

import jax
import jax.numpy as jnp
from jax.experimental import pallas as pl
from jax.experimental.pallas import tpu as pltpu


LANE = 128                    # lane width unit (vreg fast axis)
SUB = 8                       # sublane unit
MAX_LANE_MULT = 64            # lane-dense slab up to 64*128 = 8192 lanes wide
TARGET_TILE_BYTES = 8 << 20   # ~8 MiB tiles: 2 in-bufs + 2 out-bufs ≈ 32 MiB
VMEM_LIMIT_BYTES = 48 << 20   # fits v7x 64 MiB physical; lifts v5e/v6e default


def _copy_kernel(x_ref, o_ref):
    # Pure identity copy of the current tile.
    o_ref[...] = x_ref[...]


def _resolve_shape(total, shape):
    """Resolve a torch-style target shape (supports a single -1)."""
    shape = list(shape)
    if shape.count(-1) > 1:
        raise ValueError("only one dimension can be -1")
    if -1 in shape:
        known = math.prod(d for d in shape if d != -1)
        if known == 0 or total % known != 0:
            raise ValueError(f"cannot view size {total} as {tuple(shape)}")
        shape[shape.index(-1)] = total // known
    if math.prod(shape) != total:
        raise ValueError(f"cannot view size {total} as {tuple(shape)}")
    return tuple(shape)


def _copy_stream(flat):
    """Identity-copy a 1-D element stream (length % 128 == 0) through Pallas."""
    total = flat.size
    dtype = flat.dtype
    rows128 = total // LANE

    # Pull as many factors as possible into the lane dim: wide, lane-dense
    # output blocks -> unmasked vst and few grid steps.
    lane_mult = 1
    for cand in range(min(MAX_LANE_MULT, rows128), 0, -1):
        if rows128 % cand == 0:
            lane_mult = cand
            break
    lanes = LANE * lane_mult
    rows = rows128 // lane_mult
    slab = flat.reshape(rows, lanes)

    # Multi-MiB tiles; block_rows is a multiple of 8 (>=32 helps packed dtypes
    # like bf16/int8) or the full row extent.  Ragged last block is masked by
    # Pallas via the cdiv grid — no padding pass, no tail-slice pass.
    bytes_per_row = lanes * dtype.itemsize
    target_rows = max(4 * SUB, (TARGET_TILE_BYTES // bytes_per_row) // SUB * SUB)
    block_rows = rows if target_rows >= rows else int(target_rows)
    grid = (pl.cdiv(rows, block_rows),)

    copied = pl.pallas_call(
        _copy_kernel,
        out_shape=jax.ShapeDtypeStruct((rows, lanes), dtype),
        grid_spec=pltpu.PrefetchScalarGridSpec(
            num_scalar_prefetch=0,
            grid=grid,
            in_specs=[pl.BlockSpec((block_rows, lanes), lambda i: (i, 0))],
            out_specs=pl.BlockSpec((block_rows, lanes), lambda i: (i, 0)),
        ),
        compiler_params=pltpu.CompilerParams(
            dimension_semantics=("parallel",),   # megacore-shards the copy
            vmem_limit_bytes=VMEM_LIMIT_BYTES,
        ),
    )(slab)
    return copied.reshape(-1)


def _copy_view(x, out_shape):
    """Materialize a fresh buffer holding x viewed as out_shape (Pallas path)."""
    total = x.size
    flat = x.reshape(-1)
    if total == 0:
        return flat.reshape(out_shape)
    if total % LANE == 0:
        return _copy_stream(flat).reshape(out_shape)
    if total * flat.dtype.itemsize <= (4 << 20):
        # Small ragged total: single whole-array block (full-extent block
        # sidesteps the (8, 128) divisibility requirement), still no padding.
        copied = pl.pallas_call(
            _copy_kernel,
            out_shape=jax.ShapeDtypeStruct((1, total), flat.dtype),
        )(flat.reshape(1, total))
        return copied.reshape(out_shape)
    # TODO(synk): large non-128-divisible totals — use a masked tail store in
    # the last grid step instead of this single pad pass.
    pad = (-total) % LANE
    padded = _copy_stream(jnp.pad(flat, (0, pad)))
    return padded[:total].reshape(out_shape)


def view_pallas(x, shape, force_copy=False):
    """Equivalent of torch.Tensor.view(*shape).

    Default: metadata-only reshape (zero data movement — same as torch.view on
    a contiguous tensor).  Set force_copy=True to route the bytes through the
    Pallas identity-copy kernel and get a fresh buffer.
    """
    out_shape = _resolve_shape(x.size, shape)
    if not force_copy:
        return x.reshape(out_shape)
    return _copy_view(x, out_shape)


if __name__ == "__main__":
    key = jax.random.PRNGKey(0)
    # Input consistent with an NCHW conv activation: batch=2, channels=4, 16x16.
    x = jax.random.normal(key, (2, 4, 16, 16), dtype=jnp.float32)

    # View(shape=(2, -1)): flatten everything but the batch dim.
    target_shape = (2, -1)

    # Default path: pure metadata (what the PyTorch module's forward costs).
    y_meta = view_pallas(x, target_shape)

    # Pallas data path: exercised once to validate the kernel on-device.
    y_copy = view_pallas(x, target_shape, force_copy=True)
    jax.block_until_ready(y_copy)

    # Correctness check against the plain reshape reference.
    ref = x.reshape(2, -1)
    assert y_meta.shape == ref.shape and y_copy.shape == ref.shape
    assert y_meta.dtype == ref.dtype and y_copy.dtype == ref.dtype
    assert bool(jnp.array_equal(y_meta, ref))
    assert bool(jnp.array_equal(y_copy, ref))

    print("KERNEL_OK")
</pallas_src>

<mosaic_0001>
module attributes {stable_mosaic.version = 11 : i64} {
  func.func @_copy_kernel(%arg0: i32, %arg1: memref<1x2048xf32, #tpu.memory_space<vmem>>, %arg2: memref<1x2048xf32, #tpu.memory_space<vmem>>) attributes {dimension_semantics = [#tpu.dimension_semantics<parallel>], iteration_bounds = array<i64: 1>, scalar_prefetch = 0 : i64, scratch_operands = 0 : i64, tpu.core_type = #tpu.core_type<tc>, window_params = [{transform_indices = @transform_0, window_bounds = array<i64: 1, 2048>}, {transform_indices = @transform_1, window_bounds = array<i64: 1, 2048>}]} {
    %c0 = arith.constant 0 : index
    %c0_0 = arith.constant 0 : index
    %0 = vector.load %arg1[%c0, %c0_0] : memref<1x2048xf32, #tpu.memory_space<vmem>>, vector<1x2048xf32>
    %c0_1 = arith.constant 0 : index
    %c0_2 = arith.constant 0 : index
    %1 = vector.load %arg2[%c0_1, %c0_2] : memref<1x2048xf32, #tpu.memory_space<vmem>>, vector<1x2048xf32>
    tpu.vector_store %arg2[%c0_1, %c0_2], %0 {strides = array<i32>} : memref<1x2048xf32, #tpu.memory_space<vmem>>, vector<1x2048xf32>,
    return
  }
  func.func @transform_0(%arg0: i32) -> (i32, i32) {
    %c0_i32 = arith.constant 0 : i32
    %c0_i32_0 = arith.constant 0 : i32
    return %arg0, %c0_i32 : i32, i32
  }
  func.func @transform_1(%arg0: i32) -> (i32, i32) {
    %c0_i32 = arith.constant 0 : i32
    %c0_i32_0 = arith.constant 0 : i32
    return %arg0, %c0_i32 : i32, i32
  }
}

</mosaic_0001>

<llo_original>
// kernel: tpu_custom_call.1
$region0: #{tpu_custom_call.1}
  #allocation0 [shape = 'u32[]', space=smem, size = 0x4, offset = 0x4, fixed_abs, tag = 'smem constant byte address 0x4 - core index']
  #allocation1 [shape = 'u32[72,128]{1,0:T(1,128)}', space=vmem, size = 0x9000, scoped, tag = 'internal scratch']
  %s0 = inlined_call_operand.hbm [shape: f32[1,2048], index: 0, kind: input, shape index: {}]
  %s1 = inlined_call_operand.hbm [shape: f32[1,2048], index: 1, kind: output, shape index: {}]
  %s2 = sld [smem:[#allocation0]]
  $region18: #{tpu_custom_call.1} parent=0
    _
  %s4 = ssub.s32 1, %s2
  %s5 = scalar_select 0, %s4, %s2
  $region1: #{tpu_custom_call.1} parent=0
    #allocation2 [shape = 'u8[8192]{0}', space=vmem, size = 0x2000, scoped, tag = 'input window, operand 0, single buffered']
    #allocation3 [shape = 's32[1]{0}', space=sflag, size = 0x4, scoped, tag = 'scoped memory for tpu_custom_call.1']
    #allocation4 [shape = 's32[1]{0}', space=sflag, size = 0x4, scoped, tag = 'scoped memory for tpu_custom_call.1']
    #allocation5 [shape = 'u8[8192]{0}', space=vmem, size = 0x2000, scoped, tag = 'output window, operand 0, single buffered']
    %6 = vsyncpa [#allocation3], 0
    %7 = vsyncpa [#allocation4], 0
    // Predicated region
    $region2: #{tpu_custom_call.1} parent=1 // pred_check
      _
    $region3: #{tpu_custom_call.1} parent=1 // pred_check_branch
      %9 = sbr.rel (0) target = $region5
    $region4: #{tpu_custom_call.1} parent=1 // pred_region
      %11 = vsyncadd [#allocation3], 0
      %s13 = sshll.u32 %s0, 4
      %s14 = int_to_ptr.hbm [resolvable:$true] %s13
      %s15 = sshll.u32 [#allocation2], 4
      %s16 = int_to_ptr.vmem [resolvable:$true] %s15
      %18 = dma.hbm_to_vmem [thread:$0]  %s14, 256, %s16, [#allocation3]
    $region5: #{tpu_custom_call.1} parent=1 // pred_fallthru
      _
    // Predicated region
    $region6: #{tpu_custom_call.1} parent=1 // pred_check
      _
    $region7: #{tpu_custom_call.1} parent=1 // pred_check_branch
      %20 = sbr.rel (0) target = $region9
    $region8: #{tpu_custom_call.1} parent=1 // pred_region
      %22 = dma.done [#allocation3], 256
    $region9: #{tpu_custom_call.1} parent=1 // pred_fallthru
      _
    %v23 = vld [vmem:[#allocation2] sm:$0xff]
    %v24 = vld [vmem:[#allocation2 + $0x8] sm:$0xff]
    %25 = vst [vmem:[#allocation5] sm:$0xff] %v23
    %26 = vst [vmem:[#allocation5 + $0x8] sm:$0xff] %v24
    // Predicated region
    $region10: #{tpu_custom_call.1} parent=1 // pred_check
      _
    $region11: #{tpu_custom_call.1} parent=1 // pred_check_branch
      %28 = sbr.rel (0) target = $region13
    $region12: #{tpu_custom_call.1} parent=1 // pred_region
      %30 = vsyncadd [#allocation4], 0
      %s32 = sshll.u32 [#allocation5], 4
      %s33 = int_to_ptr.vmem [resolvable:$true] %s32
      %s34 = sshll.u32 %s1, 4
      %s35 = int_to_ptr.hbm [resolvable:$true] %s34
      %37 = dma.vmem_to_hbm [thread:$0]  %s33, 256, %s35, [#allocation4]
    $region13: #{tpu_custom_call.1} parent=1 // pred_fallthru
      _
    // Predicated region
    $region14: #{tpu_custom_call.1} parent=1 // pred_check
      _
    $region15: #{tpu_custom_call.1} parent=1 // pred_check_branch
      %39 = sbr.rel (0) target = $region17
    $region16: #{tpu_custom_call.1} parent=1 // pred_region
      %41 = dma.done [#allocation4], 256
    $region17: #{tpu_custom_call.1} parent=1 // pred_fallthru
      _
    %42 = vsyncpa [#allocation3], 1
    %43 = vsyncpa [#allocation4], 1

</llo_original>
